<compile_context>
chip_gen: v6e
topology: v6e:2x2x1
jax: 0.10.0
libtpu: 0.0.40
codegen_flags: <defaults>
</compile_context>

<pallas_src>
import jax
import jax.numpy as jnp
from jax.experimental import pallas as pl
from jax.experimental.pallas import tpu as pltpu


def _round_up(x, m):
    return (x + m - 1) // m * m


# --------------------------------------------------------------------------
# Pass 1: per-tile conv matmul (MXU, bf16 x bf16 -> f32 accumulate) emitting
# only per-tile BatchNorm partial statistics (sum, sum-of-squares).
# The conv result itself is NOT written to HBM (recomputed in pass 2).
#   patches tile: (MT, Kdim_p) bf16, wmat: (Kdim_p, Cp) bf16
#   stats tile:   (1, 8, Cp) f32; row 0 = sum, row 1 = sum of squares.
# --------------------------------------------------------------------------
def _stats_kernel(patches_ref, wmat_ref, stats_ref):
    conv = jnp.dot(patches_ref[...], wmat_ref[...],
                   preferred_element_type=jnp.float32)
    s = jnp.sum(conv, axis=0, keepdims=True)           # (1, Cp)
    ss = jnp.sum(conv * conv, axis=0, keepdims=True)   # (1, Cp)
    pad = jnp.zeros((6, s.shape[1]), jnp.float32)      # sublane-align to 8 rows
    stats_ref[...] = jnp.concatenate([s, ss, pad], axis=0)[None]


# --------------------------------------------------------------------------
# Pass 2: recompute the conv tile on the MXU and fuse BatchNorm
# (pre-folded per-channel scale/shift) + ReLU.  Output is lane-dense.
# --------------------------------------------------------------------------
def _matmul_bn_relu_kernel(patches_ref, wmat_ref, scale_ref, shift_ref, out_ref):
    conv = jnp.dot(patches_ref[...], wmat_ref[...],
                   preferred_element_type=jnp.float32)
    y = conv * scale_ref[...] + shift_ref[...]
    out_ref[...] = jnp.maximum(y, 0.0).astype(out_ref.dtype)


def _choose_m_tile(M, Kdim_p, Cp, in_isz, out_isz, m_tile, vmem_budget_bytes):
    """Largest row tile that (a) keeps >= 2 grid steps and (b) fits VMEM."""
    mt = m_tile
    # (a) never collapse the 1-D "parallel" grid to a single step
    #     (v7x has two TensorCores; also keeps the DMA pipeline busy).
    mt = min(mt, max(8, _round_up((M + 1) // 2, 8)))
    # (b) double-buffered patches-in + out-tile, plus resident wmat/scale/shift.
    fixed = Kdim_p * Cp * in_isz + 4 * Cp * 4
    per_row = 2 * (Kdim_p * in_isz + Cp * out_isz)
    max_rows = max(8, (vmem_budget_bytes - fixed) // per_row)
    mt = min(mt, max_rows // 8 * 8)
    return max(8, mt)


def conv_transpose_block(x, weight, bias, gamma, beta, *, stride=1, padding=0,
                         output_padding=0, eps=1e-5, m_tile=1024,
                         compute_dtype=jnp.bfloat16, out_dtype=jnp.float32,
                         out_layout="NCHW"):
    """ConvTransposeBlock forward (default config: ConvTranspose2d + BN(train) + ReLU).

    x: (N, Cin, H, W); weight: (Cin, Cout, K, K) (PyTorch ConvTranspose2d layout).
    """
    # The ConvTranspose2d bias is a per-channel constant and is exactly canceled
    # by training-mode BatchNorm centering, so it is not applied.
    # TODO(synk): eval-mode BN (running stats) would need the bias plus
    # running_mean/var updates reintroduced.
    del bias

    N, Cin, H, W = x.shape
    Cin_w, Cout, K, K2 = weight.shape
    assert Cin_w == Cin and K == K2

    Hout = (H - 1) * stride - 2 * padding + K + output_padding
    Wout = (W - 1) * stride - 2 * padding + K + output_padding

    # --- glue (plain JAX): rewrite transposed conv as a direct conv of the
    # (input-dilated, zero-padded) input with the spatially flipped kernel,
    # in NHWC so the channel axis is innermost (lane axis).  Cast to the
    # compute dtype *before* the K^2 im2col expansion (halves wrapper traffic).
    Hd, Wd = (H - 1) * stride + 1, (W - 1) * stride + 1
    x_nhwc = jnp.transpose(x, (0, 2, 3, 1)).astype(compute_dtype)  # (N,H,W,Cin)
    xd = jnp.zeros((N, Hd, Wd, Cin), compute_dtype)
    xd = xd.at[:, ::stride, ::stride, :].set(x_nhwc)
    pad_lo = K - 1 - padding
    pad_hi = K - 1 - padding + output_padding
    xp = jnp.pad(xd, ((0, 0), (pad_lo, pad_hi), (pad_lo, pad_hi), (0, 0)))

    # im2col, column order (kh, kw, cin).
    # TODO(synk): fold this gather into the kernels for production Cin
    # (trailing "arbitrary" grid axis + VMEM accumulator over shifted slabs).
    M = N * Hout * Wout
    cols = [xp[:, kh:kh + Hout, kw:kw + Wout, :]
            for kh in range(K) for kw in range(K)]
    patches = jnp.concatenate(cols, axis=-1).reshape(M, K * K * Cin)

    # wmat[(kh,kw,i), o] = weight[i, o, K-1-kh, K-1-kw]  (flipped kernel)
    wflip = weight[:, :, ::-1, ::-1]                               # (Cin,Cout,K,K)
    wmat = jnp.transpose(wflip, (2, 3, 0, 1)).reshape(K * K * Cin, Cout)
    wmat = wmat.astype(compute_dtype)

    # --- pad to TPU-friendly shapes ----------------------------------------
    Kdim = K * K * Cin
    Kdim_p = _round_up(Kdim, 16)              # bf16 sublane packing friendly
    Cp = _round_up(Cout, 128)                 # lane-dense output stores

    in_isz = jnp.dtype(compute_dtype).itemsize
    out_isz = jnp.dtype(out_dtype).itemsize
    VMEM_BUDGET = 40 * 1024 * 1024            # fits comfortably in v7x's 64 MiB
    MT = _choose_m_tile(M, Kdim_p, Cp, in_isz, out_isz, m_tile, VMEM_BUDGET)
    M_pad = _round_up(M, MT)
    nt = M_pad // MT

    patches_p = jnp.pad(patches, ((0, M_pad - M), (0, Kdim_p - Kdim)))
    wmat_p = jnp.pad(wmat, ((0, Kdim_p - Kdim), (0, Cp - Cout)))

    cparams = pltpu.CompilerParams(
        dimension_semantics=("parallel",),
        vmem_limit_bytes=48 * 1024 * 1024)

    cost1 = pl.CostEstimate(
        flops=2 * M_pad * Kdim_p * Cp,
        transcendentals=0,
        bytes_accessed=(M_pad * Kdim_p * in_isz + Kdim_p * Cp * in_isz
                        + nt * 8 * Cp * 4))

    # --- pass 1: tiled matmul -> per-tile BN partial sums only --------------
    stats = pl.pallas_call(
        _stats_kernel,
        out_shape=jax.ShapeDtypeStruct((nt, 8, Cp), jnp.float32),
        grid=(nt,),
        in_specs=[
            pl.BlockSpec((MT, Kdim_p), lambda i: (i, 0)),
            pl.BlockSpec((Kdim_p, Cp), lambda i: (0, 0)),
        ],
        out_specs=pl.BlockSpec((1, 8, Cp), lambda i: (i, 0, 0)),
        compiler_params=cparams,
        cost_estimate=cost1,
    )(patches_p, wmat_p)

    # --- global training-mode BN statistics (tiny per-channel math in JAX) --
    # Padded rows/channels are all-zero so they contribute nothing to the
    # sums; divide by the true M.  f32 E[x^2]-E[x]^2 is adequate at these
    # magnitudes; for very large M / large |mean|/std, switch to a shifted or
    # Welford-merged formulation.
    col_sum = jnp.sum(stats[:, 0, :], axis=0)                      # (Cp,)
    col_ssq = jnp.sum(stats[:, 1, :], axis=0)                      # (Cp,)
    m = jnp.float32(M)
    mean = col_sum / m
    var = jnp.maximum(col_ssq / m - mean * mean, 0.0)              # biased var
    inv = jax.lax.rsqrt(var + jnp.float32(eps))
    gamma_p = jnp.pad(gamma.astype(jnp.float32), (0, Cp - Cout))
    beta_p = jnp.pad(beta.astype(jnp.float32), (0, Cp - Cout))
    scale = (gamma_p * inv).reshape(1, Cp)
    shift = (beta_p - mean * gamma_p * inv).reshape(1, Cp)

    cost2 = pl.CostEstimate(
        flops=2 * M_pad * Kdim_p * Cp + 3 * M_pad * Cp,
        transcendentals=0,
        bytes_accessed=(M_pad * Kdim_p * in_isz + Kdim_p * Cp * in_isz
                        + 2 * Cp * 4 + M_pad * Cp * out_isz))

    # --- pass 2: recompute matmul + fused BN scale/shift + ReLU, tiled over M
    out2d = pl.pallas_call(
        _matmul_bn_relu_kernel,
        out_shape=jax.ShapeDtypeStruct((M_pad, Cp), out_dtype),
        grid=(nt,),
        in_specs=[
            pl.BlockSpec((MT, Kdim_p), lambda i: (i, 0)),
            pl.BlockSpec((Kdim_p, Cp), lambda i: (0, 0)),
            pl.BlockSpec((1, Cp), lambda i: (0, 0)),
            pl.BlockSpec((1, Cp), lambda i: (0, 0)),
        ],
        out_specs=pl.BlockSpec((MT, Cp), lambda i: (i, 0)),
        compiler_params=cparams,
        cost_estimate=cost2,
    )(patches_p, wmat_p, scale, shift)

    out_nhwc = out2d[:M, :Cout].reshape(N, Hout, Wout, Cout)
    if out_layout == "NHWC":      # cheaper: skips one full HBM transpose pass
        return out_nhwc
    return jnp.transpose(out_nhwc, (0, 3, 1, 2))


def _reference(x, weight, bias, gamma, beta, *, stride=1, padding=0,
               output_padding=0, eps=1e-5, compute_dtype=jnp.bfloat16):
    """Pure-JAX reference of ConvTranspose2d + BatchNorm2d(train) + ReLU.

    Matmul operands are rounded to `compute_dtype` (then accumulated in f32)
    exactly like the kernel's bf16 MXU path, so the comparison isolates the
    kernel logic from the chosen operand precision.
    """
    N, Cin, H, W = x.shape
    _, Cout, K, _ = weight.shape
    Hout = (H - 1) * stride - 2 * padding + K + output_padding
    Wout = (W - 1) * stride - 2 * padding + K + output_padding
    xr = x.astype(compute_dtype).astype(jnp.float32)
    wr = weight.astype(compute_dtype).astype(jnp.float32)
    Hd, Wd = (H - 1) * stride + 1, (W - 1) * stride + 1
    xd = jnp.zeros((N, Cin, Hd, Wd), jnp.float32)
    xd = xd.at[:, :, ::stride, ::stride].set(xr)
    pad_lo = K - 1 - padding
    pad_hi = K - 1 - padding + output_padding
    xp = jnp.pad(xd, ((0, 0), (0, 0), (pad_lo, pad_hi), (pad_lo, pad_hi)))
    ref = jnp.zeros((N, Cout, Hout, Wout), jnp.float32)
    for kh in range(K):
        for kw in range(K):
            ref = ref + jnp.einsum('nihw,io->nohw',
                                   xp[:, :, kh:kh + Hout, kw:kw + Wout],
                                   wr[:, :, K - 1 - kh, K - 1 - kw])
    ref = ref + bias[None, :, None, None]     # canceled by BN; kept for fidelity
    mean = ref.mean(axis=(0, 2, 3), keepdims=True)
    var = ref.var(axis=(0, 2, 3), keepdims=True)
    ref = gamma[None, :, None, None] * (ref - mean) / jnp.sqrt(var + eps) \
        + beta[None, :, None, None]
    return jnp.maximum(ref, 0.0)


if __name__ == "__main__":
    key = jax.random.PRNGKey(0)
    k_x, k_w, k_b, k_g, k_be = jax.random.split(key, 5)

    N, Cin, Cout, H, W, K = 2, 4, 8, 16, 16, 3

    x = jax.random.normal(k_x, (N, Cin, H, W), dtype=jnp.float32)
    # ConvTranspose2d params (deterministic synthetic init).
    weight = 0.1 * jax.random.normal(k_w, (Cin, Cout, K, K), dtype=jnp.float32)
    bias = 0.1 * jax.random.normal(k_b, (Cout,), dtype=jnp.float32)
    # BatchNorm2d affine params (non-trivial to exercise the fused scale/shift).
    gamma = 1.0 + 0.1 * jax.random.normal(k_g, (Cout,), dtype=jnp.float32)
    beta = 0.1 * jax.random.normal(k_be, (Cout,), dtype=jnp.float32)

    out = conv_transpose_block(x, weight, bias, gamma, beta)
    out = jax.block_until_ready(out)

    assert out.shape == (N, Cout, H + K - 1, W + K - 1), out.shape

    ref = _reference(x, weight, bias, gamma, beta)
    max_err = float(jnp.max(jnp.abs(out - ref)))
    assert max_err < 2e-4, max_err

    print("KERNEL_OK")
</pallas_src>

<mosaic_0001>
module attributes {stable_mosaic.version = 11 : i64} {
  func.func @_stats_kernel(%arg0: i32, %arg1: memref<328x48xbf16, #tpu.memory_space<vmem>>, %arg2: memref<48x128xbf16, #tpu.memory_space<vmem>>, %arg3: memref<1x8x128xf32, #tpu.memory_space<vmem>>) attributes {dimension_semantics = [#tpu.dimension_semantics<parallel>], iteration_bounds = array<i64: 2>, scalar_prefetch = 0 : i64, scratch_operands = 0 : i64, tpu.core_type = #tpu.core_type<tc>, window_params = [{transform_indices = @transform_0, window_bounds = array<i64: 328, 48>}, {pipeline_mode = #tpu.pipeline_mode<synchronous>, transform_indices = @transform_1, window_bounds = array<i64: 48, 128>}, {transform_indices = @transform_2, window_bounds = array<i64: 1, 8, 128>}]} {
    %c0 = arith.constant 0 : index
    %c0_0 = arith.constant 0 : index
    %0 = vector.load %arg1[%c0, %c0_0] : memref<328x48xbf16, #tpu.memory_space<vmem>>, vector<328x48xbf16>
    %c0_1 = arith.constant 0 : index
    %c0_2 = arith.constant 0 : index
    %1 = vector.load %arg2[%c0_1, %c0_2] : memref<48x128xbf16, #tpu.memory_space<vmem>>, vector<48x128xbf16>
    %cst = arith.constant dense<0.000000e+00> : vector<328x128xf32>
    %2 = tpu.matmul %0, %1, %cst {dimension_numbers = #tpu.dot_dimension_numbers<[1], [0], [0], [1], [0, 0, 1, 1], [], []>} : vector<328x48xbf16>, vector<48x128xbf16>, vector<328x128xf32> -> vector<328x128xf32>
    %cst_3 = arith.constant dense<0.000000e+00> : vector<128xf32>
    %3 = vector.multi_reduction <add>, %2, %cst_3 [0] : vector<328x128xf32> to vector<128xf32>
    %4 = vector.shape_cast %3 : vector<128xf32> to vector<1x128xf32>
    %5 = arith.mulf %2, %2 : vector<328x128xf32>
    %cst_4 = arith.constant dense<0.000000e+00> : vector<128xf32>
    %6 = vector.multi_reduction <add>, %5, %cst_4 [0] : vector<328x128xf32> to vector<128xf32>
    %7 = vector.shape_cast %6 : vector<128xf32> to vector<1x128xf32>
    %cst_5 = arith.constant 0.000000e+00 : f32
    %8 = vector.broadcast %cst_5 : f32 to vector<6x128xf32>
    %9 = tpu.concatenate %4, %7, %8 in 0 : vector<1x128xf32>, vector<1x128xf32>, vector<6x128xf32> -> vector<8x128xf32>
    %10 = vector.shape_cast %9 : vector<8x128xf32> to vector<1x8x128xf32>
    %c0_6 = arith.constant 0 : index
    %c0_7 = arith.constant 0 : index
    %c0_8 = arith.constant 0 : index
    %11 = vector.load %arg3[%c0_6, %c0_7, %c0_8] : memref<1x8x128xf32, #tpu.memory_space<vmem>>, vector<1x8x128xf32>
    tpu.vector_store %arg3[%c0_6, %c0_7, %c0_8], %10 {strides = array<i32>} : memref<1x8x128xf32, #tpu.memory_space<vmem>>, vector<1x8x128xf32>,
    return
  }
  func.func @transform_0(%arg0: i32) -> (i32, i32) {
    %c0_i32 = arith.constant 0 : i32
    %c0_i32_0 = arith.constant 0 : i32
    return %arg0, %c0_i32 : i32, i32
  }
  func.func @transform_1(%arg0: i32) -> (i32, i32) {
    %c0_i32 = arith.constant 0 : i32
    %c0_i32_0 = arith.constant 0 : i32
    %c0_i32_1 = arith.constant 0 : i32
    return %c0_i32, %c0_i32_0 : i32, i32
  }
  func.func @transform_2(%arg0: i32) -> (i32, i32, i32) {
    %c0_i32 = arith.constant 0 : i32
    %c0_i32_0 = arith.constant 0 : i32
    %c0_i32_1 = arith.constant 0 : i32
    return %arg0, %c0_i32, %c0_i32_0 : i32, i32, i32
  }
}

</mosaic_0001>

<llo_original>
// kernel: tpu_custom_call.1
$region0: #{tpu_custom_call.1}
  #allocation0 [shape = 'u32[]', space=smem, size = 0x4, offset = 0x4, fixed_abs, tag = 'smem constant byte address 0x4 - core index']
  #allocation1 [shape = 'u32[144,128]{1,0:T(1,128)}', space=vmem, size = 0x12000, scoped, tag = 'internal scratch']
  %s0 = inlined_call_operand.vmem [shape: bf16[656,48], index: 0, kind: input, shape index: {}]
  %s1 = inlined_call_operand.vmem [shape: bf16[48,128], index: 1, kind: input, shape index: {}]
  %s2 = inlined_call_operand.hbm [shape: f32[2,8,128], index: 2, kind: output, shape index: {}]
  %s3 = sld [smem:[#allocation0]]
  $region41: #{tpu_custom_call.1} parent=0
    _
  %s5 = ssub.s32 1, %s3
  %s6 = scalar_select 0, %s5, %s3
  $region1: #{tpu_custom_call.1} parent=0
    #allocation2 [shape = 'u8[8192]{0}', space=vmem, size = 0x2000, scoped, tag = 'output window, operand 0']
    #allocation3 [shape = 's32[2]{0}', space=sflag, size = 0x8, scoped, tag = 'scoped memory for tpu_custom_call.1']
    %7 = vsyncpa [#allocation3], 0
    %s8 = scalar_lea.sflag [#allocation3], 1
    %9 = vsyncpa %s8, 0
    loop: start=0, step=1, limit=4
    $region2: #{tpu_custom_call.1} parent=1 // loop_pre_header
      _
    $region3: #{tpu_custom_call.1} parent=1 // loop_header
      %s11 = sphi 0, %s15
      %p12 = scmp.ge.s32.totalorder %s11, 4
      %s21 = sphi 0, %s23
      %s24 = sphi 0, %s21
      %s25 = sphi 0, %s24
      %s41 = sphi 0, %s25
      %s45 = sphi 0, %s45
      %s47 = sphi 0, %s45
      %s48 = sphi 0, %s47
      %s62 = sphi 0, %s48
      %s68 = sphi 0, %s70
      %s71 = sphi 0, %s68
      %s72 = sphi 0, %s71
      %s88 = sphi 0, %s72
    $region4: #{tpu_custom_call.1} parent=1 // loop_header_branch
      %14 = sbr.rel (%p12) target = $region8
    $region5: #{tpu_custom_call.1} parent=1 // loop_body
      %s16 = ssub.s32 %s11, 1
      %s17 = ssub.s32 %s11, 2
      %s18 = sadd.s32 %s11, 1
      %s19 = ssub.s32 %s11, %s18
      %p20 = scmp.eq.s32.totalorder %s19, 0
      %s22 = sadd.s32 %s21, 1
      %s23 = scalar_select %p20, %s21, %s22
      %p26 = pneg %p20
      %p27 = scmp.eq.s32.totalorder %s11, 1
      %p28 = por %p26, %p27
      %p29 = scmp.ne.s32.totalorder %s21, %s24
      %p30 = scmp.eq.s32.totalorder %s11, 0
      %p31 = por %p29, %p30
      %p32 = scmp.ne.s32.totalorder %s21, %s24
      %p33 = scmp.eq.s32.totalorder %s16, 1
      %p34 = por %p32, %p33
      %p35 = scmp.ne.s32.totalorder %s24, %s25
      %p36 = scmp.eq.s32.totalorder %s16, 0
      %p37 = por %p35, %p36
      %p38 = scmp.ne.s32.totalorder %s24, %s25
      %p39 = scmp.eq.s32.totalorder %s17, 1
      %p40 = por %p38, %p39
      %p42 = scmp.ne.s32.totalorder %s25, %s41
      %p43 = scmp.eq.s32.totalorder %s17, 0
      %p44 = por %p42, %p43
      %s46 = sadd.s32 %s45, 1
      %p49 = scmp.eq.s32.totalorder %s11, 1
      %p50 = scmp.ne.s32.totalorder %s45, %s47
      %p51 = scmp.eq.s32.totalorder %s11, 0
      %p52 = por %p50, %p51
      %p53 = scmp.ne.s32.totalorder %s45, %s47
      %p54 = scmp.eq.s32.totalorder %s16, 1
      %p55 = por %p53, %p54
      %p56 = scmp.ne.s32.totalorder %s47, %s48
      %p57 = scmp.eq.s32.totalorder %s16, 0
      %p58 = por %p56, %p57
      %p59 = scmp.ne.s32.totalorder %s47, %s48
      %p60 = scmp.eq.s32.totalorder %s17, 1
      %p61 = por %p59, %p60
      %p63 = scmp.ne.s32.totalorder %s48, %s62
      %p64 = scmp.eq.s32.totalorder %s17, 0
      %p65 = por %p63, %p64
      %s66 = ssub.s32 %s11, %s18
      %p67 = scmp.eq.s32.totalorder %s66, 0
      %s69 = sadd.s32 %s68, 1
      %s70 = scalar_select %p67, %s68, %s69
      %p73 = pneg %p67
      %p74 = scmp.eq.s32.totalorder %s11, 1
      %p75 = por %p73, %p74
      %p76 = scmp.ne.s32.totalorder %s68, %s71
      %p77 = scmp.eq.s32.totalorder %s11, 0
      %p78 = por %p76, %p77
      %p79 = scmp.ne.s32.totalorder %s68, %s71
      %p80 = scmp.eq.s32.totalorder %s16, 1
      %p81 = por %p79, %p80
      %p82 = scmp.ne.s32.totalorder %s71, %s72
      %p83 = scmp.eq.s32.totalorder %s16, 0
      %p84 = por %p82, %p83
      %p85 = scmp.ne.s32.totalorder %s71, %s72
      %p86 = scmp.eq.s32.totalorder %s17, 1
      %p87 = por %p85, %p86
      %p89 = scmp.ne.s32.totalorder %s72, %s88
      %p90 = scmp.eq.s32.totalorder %s17, 0
      %p91 = por %p89, %p90
      %p92 = scmp.le.s32.totalorder 1, %s11
      %p93 = scmp.lt.s32.totalorder %s11, 3
      %p94 = pnand %p92, %p93
      %p95 = pneg %p94
      // Predicated region
      $region9: #{tpu_custom_call.1} parent=5 // pred_check
        _
      $region10: #{tpu_custom_call.1} parent=5 // pred_check_branch
        %97 = sbr.rel (%p94) target = $region12
      $region11: #{tpu_custom_call.1} parent=5 // pred_region
        %s98 = ssub.s32 %s11, 1
        // Predicated region
        $region13: #{tpu_custom_call.1} parent=11 // pred_check
          %p99 = pneg %p58
        $region14: #{tpu_custom_call.1} parent=11 // pred_check_branch
          %101 = sbr.rel (%p99) target = $region16
        $region15: #{tpu_custom_call.1} parent=11 // pred_region
          _
        $region16: #{tpu_custom_call.1} parent=11 // pred_fallthru
          _
      $region12: #{tpu_custom_call.1} parent=5 // pred_fallthru
        _
      %p102 = scmp.lt.s32.totalorder %s11, 2
      // Predicated region
      $region17: #{tpu_custom_call.1} parent=5 // pred_check
        %p103 = pneg %p102
      $region18: #{tpu_custom_call.1} parent=5 // pred_check_branch
        %105 = sbr.rel (%p103) target = $region20
      $region19: #{tpu_custom_call.1} parent=5 // pred_region
        // Predicated region
        $region21: #{tpu_custom_call.1} parent=19 // pred_check
          %p106 = pneg %p31
        $region22: #{tpu_custom_call.1} parent=19 // pred_check_branch
          %108 = sbr.rel (%p106) target = $region24
        $region23: #{tpu_custom_call.1} parent=19 // pred_region
          %s109 = smul.u32 41, %s11
          %p110 = scmp.lt.s32.totalorder %s109, 81
          %s111 = scalar_select %p110, %s109, 81
          %s112 = smul.addr %s111, 4
          %s113 = scalar_lea.vmem %s0, %s112
          %s114 = smul.u32 41, %s11
        $region24: #{tpu_custom_call.1} parent=19 // pred_fallthru
          _
      $region20: #{tpu_custom_call.1} parent=5 // pred_fallthru
        _
      %p115 = scmp.le.s32.totalorder 1, %s11
      %p116 = scmp.lt.s32.totalorder %s11, 3
      %p117 = pnand %p115, %p116
      %p118 = pneg %p117
      // Predicated region
      $region25: #{tpu_custom_call.1} parent=5 // pred_check
        _
      $region26: #{tpu_custom_call.1} parent=5 // pred_check_branch
        %120 = sbr.rel (%p117) target = $region28
      $region27: #{tpu_custom_call.1} parent=5 // pred_region
        %s121 = ssub.s32 %s11, 1
        %s122 = smul.u32 41, %s16
        %p123 = scmp.lt.s32.totalorder %s122, 81
        %s124 = scalar_select %p123, %s122, 81
        %s125 = smul.addr %s124, 4
        %s126 = scalar_lea.vmem %s0, %s125
        %p127 = pneg %p37
        %p128 = pneg %p34
        %p129 = pneg %p58
        %p130 = pneg %p55
        %p131 = pneg %p84
        %p132 = pneg %p81
        %s133 = sand.u32 %s71, 1
        %s134 = scalar_lea.sflag [#allocation3], %s133
        %s135 = sand.u32 %s71, 1
        %s136 = smul.addr %s135, 8
        %s137 = scalar_lea.vmem [#allocation2], %s136
        %s138 = smul.u32 41, %s16
        %p139 = scmp.lt.s32.totalorder %s138, 81
        %s140 = scalar_select %p139, %s138, 81
        %s141 = smul.addr %s140, 4
        %s142 = scalar_lea.vmem %s0, %s141
        %s143 = smul.u32 41, %s16
        %v145 = vld [vmem:[%s142] sm:$0xf]
        %v146 = vld [vmem:[%s142 + $0x4] sm:$0xf]
        %v147 = vld [vmem:[%s142 + $0x8] sm:$0xf]
        %v148 = vld [vmem:[%s142 + $0xc] sm:$0xf]
        %v149 = vld [vmem:[%s142 + $0x10] sm:$0xf]
        %v150 = vld [vmem:[%s142 + $0x14] sm:$0xf]
        %v151 = vld [vmem:[%s142 + $0x18] sm:$0xf]
        %v152 = vld [vmem:[%s142 + $0x1c] sm:$0xf]
        %v153 = vld [vmem:[%s142 + $0x20] sm:$0xf]
        %v154 = vld [vmem:[%s142 + $0x24] sm:$0xf]
        %v155 = vld [vmem:[%s142 + $0x28] sm:$0xf]
        %v156 = vld [vmem:[%s142 + $0x2c] sm:$0xf]
        %v157 = vld [vmem:[%s142 + $0x30] sm:$0xf]
        %v158 = vld [vmem:[%s142 + $0x34] sm:$0xf]
        %v159 = vld [vmem:[%s142 + $0x38] sm:$0xf]
        %v160 = vld [vmem:[%s142 + $0x3c] sm:$0xf]
        %v161 = vld [vmem:[%s142 + $0x40] sm:$0xf]
        %v162 = vld [vmem:[%s142 + $0x44] sm:$0xf]
        %v163 = vld [vmem:[%s142 + $0x48] sm:$0xf]
        %v164 = vld [vmem:[%s142 + $0x4c] sm:$0xf]
        %v165 = vld [vmem:[%s142 + $0x50] sm:$0xf]
        %v166 = vld [vmem:[%s142 + $0x54] sm:$0xf]
        %v167 = vld [vmem:[%s142 + $0x58] sm:$0xf]
        %v168 = vld [vmem:[%s142 + $0x5c] sm:$0xf]
        %v169 = vld [vmem:[%s142 + $0x60] sm:$0xf]
        %v170 = vld [vmem:[%s142 + $0x64] sm:$0xf]
        %v171 = vld [vmem:[%s142 + $0x68] sm:$0xf]
        %v172 = vld [vmem:[%s142 + $0x6c] sm:$0xf]
        %v173 = vld [vmem:[%s142 + $0x70] sm:$0xf]
        %v174 = vld [vmem:[%s142 + $0x74] sm:$0xf]
        %v175 = vld [vmem:[%s142 + $0x78] sm:$0xf]
        %v176 = vld [vmem:[%s142 + $0x7c] sm:$0xf]
        %v177 = vld [vmem:[%s142 + $0x80] sm:$0xf]
        %v178 = vld [vmem:[%s142 + $0x84] sm:$0xf]
        %v179 = vld [vmem:[%s142 + $0x88] sm:$0xf]
        %v180 = vld [vmem:[%s142 + $0x8c] sm:$0xf]
        %v181 = vld [vmem:[%s142 + $0x90] sm:$0xf]
        %v182 = vld [vmem:[%s142 + $0x94] sm:$0xf]
        %v183 = vld [vmem:[%s142 + $0x98] sm:$0xf]
        %v184 = vld [vmem:[%s142 + $0x9c] sm:$0xf]
        %v185 = vld [vmem:[%s142 + $0xa0] sm:$0xf]
        %v186 = vld [vmem:[%s1] sm:$0xf]
        %v187 = vld [vmem:[%s1 + $0x4] sm:$0xf]
        %v188 = vld [vmem:[%s1 + $0x8] sm:$0xf]
        %v189 = vld [vmem:[%s1 + $0xc] sm:$0xf]
        %v190 = vld [vmem:[%s1 + $0x10] sm:$0xf]
        %v191 = vld [vmem:[%s1 + $0x14] sm:$0xf]
        %v233 = vunpack.c.l.b16 %v145
        %v234 = vunpack.c.l.b16 %v146
        %v235 = vunpack.c.l.b16 %v147
        %v236 = vunpack.c.l.b16 %v148
        %v237 = vunpack.c.l.b16 %v149
        %v238 = vunpack.c.l.b16 %v150
        %v239 = vunpack.c.l.b16 %v151
        %v240 = vunpack.c.l.b16 %v152
        %v241 = vunpack.c.l.b16 %v153
        %v242 = vunpack.c.l.b16 %v154
        %v243 = vunpack.c.l.b16 %v155
        %v244 = vunpack.c.l.b16 %v156
        %v245 = vunpack.c.l.b16 %v157
        %v246 = vunpack.c.l.b16 %v158
        %v247 = vunpack.c.l.b16 %v159
        %v248 = vunpack.c.l.b16 %v160
        %v249 = vunpack.c.l.b16 %v161
        %v250 = vunpack.c.l.b16 %v162
        %v251 = vunpack.c.l.b16 %v163
        %v252 = vunpack.c.l.b16 %v164
        %v253 = vunpack.c.l.b16 %v165
        %v254 = vunpack.c.l.b16 %v166
        %v255 = vunpack.c.l.b16 %v167
        %v256 = vunpack.c.l.b16 %v168
        %v257 = vunpack.c.l.b16 %v169
        %v258 = vunpack.c.l.b16 %v170
        %v259 = vunpack.c.l.b16 %v171
        %v260 = vunpack.c.l.b16 %v172
        %v261 = vunpack.c.l.b16 %v173
        %v262 = vunpack.c.l.b16 %v174
        %v263 = vunpack.c.l.b16 %v175
        %v264 = vunpack.c.l.b16 %v176
        %v265 = vunpack.c.l.b16 %v177
        %v266 = vunpack.c.l.b16 %v178
        %v267 = vunpack.c.l.b16 %v179
        %v268 = vunpack.c.l.b16 %v180
        %v269 = vunpack.c.l.b16 %v181
        %v270 = vunpack.c.l.b16 %v182
        %v271 = vunpack.c.l.b16 %v183
        %v272 = vunpack.c.l.b16 %v184
        %v273 = vunpack.c.l.b16 %v185
        %v274 = vpack.c.b16 %v234, %v233
        %v275 = vpack.c.b16 %v236, %v235
        %v276 = vpack.c.b16 %v238, %v237
        %v277 = vpack.c.b16 %v240, %v239
        %v278 = vpack.c.b16 %v242, %v241
        %v279 = vpack.c.b16 %v244, %v243
        %v280 = vpack.c.b16 %v246, %v245
        %v281 = vpack.c.b16 %v248, %v247
        %v282 = vpack.c.b16 %v250, %v249
        %v283 = vpack.c.b16 %v252, %v251
        %v284 = vpack.c.b16 %v254, %v253
        %v285 = vpack.c.b16 %v256, %v255
        %v286 = vpack.c.b16 %v258, %v257
        %v287 = vpack.c.b16 %v260, %v259
        %v288 = vpack.c.b16 %v262, %v261
        %v289 = vpack.c.b16 %v264, %v263
        %v290 = vpack.c.b16 %v266, %v265
        %v291 = vpack.c.b16 %v268, %v267
        %v292 = vpack.c.b16 %v270, %v269
        %v293 = vpack.c.b16 %v272, %v271
        %v294 = vpack.c.b16 %v273, %v273
        %v301 = vunpack.c.l.b16 %v186
        %v302 = vunpack.c.l.b16 %v187
        %v303 = vunpack.c.l.b16 %v188
        %v304 = vunpack.c.l.b16 %v189
        %v305 = vunpack.c.l.b16 %v190
        %v306 = vunpack.c.l.b16 %v191
        %v307 = vpack.c.b16 %v302, %v301
        %v308 = vpack.c.b16 %v304, %v303
        %v309 = vpack.c.b16 %v306, %v305
        %vm313 = vcmask 392192
        %v315 = vsel %vm313, %v274, 0
        %v318 = vsel %vm313, %v275, 0
        %v321 = vsel %vm313, %v276, 0
        %v324 = vsel %vm313, %v277, 0
        %v327 = vsel %vm313, %v278, 0
        %v330 = vsel %vm313, %v279, 0
        %v333 = vsel %vm313, %v280, 0
        %v336 = vsel %vm313, %v281, 0
        %v339 = vsel %vm313, %v282, 0
        %v342 = vsel %vm313, %v283, 0
        %v345 = vsel %vm313, %v284, 0
        %v348 = vsel %vm313, %v285, 0
        %v351 = vsel %vm313, %v286, 0
        %v354 = vsel %vm313, %v287, 0
        %v357 = vsel %vm313, %v288, 0
        %v360 = vsel %vm313, %v289, 0
        %v363 = vsel %vm313, %v290, 0
        %v366 = vsel %vm313, %v291, 0
        %v369 = vsel %vm313, %v292, 0
        %v372 = vsel %vm313, %v293, 0
        %v375 = vsel %vm313, %v294, 0
        %377 = vmatprep.subr.bf16.mxu0 0
        %378 = vmatpush1.bf16.msra.mxu0 0
        %379 = vmatprep.subr.bf16.mxu0 0
        %380 = vmatpush1.bf16.msra.mxu0 0
        %381 = vmatprep.subr.bf16.mxu0 0
        %382 = vmatpush1.bf16.msra.mxu0 0
        %383 = vmatprep.subr.bf16.mxu0 0
        %384 = vmatpush1.bf16.msra.mxu0 0
        %385 = vmatprep.subr.bf16.mxu0 0
        %386 = vmatpush1.bf16.msra.mxu0 0
        %387 = vmatprep.subr.bf16.mxu0 0
        %388 = vmatpush1.bf16.msra.mxu0 %v309
        %389 = vmatprep.subr.bf16.mxu0 0
        %390 = vmatpush1.bf16.msra.mxu0 %v308
        %391 = vmatprep.subr.bf16.mxu0 0
        %392 = vmatpush1.bf16.msra.mxu0 %v307
        %393 = vmatprep.subr.bf16.mxu0 0
        %394 = vmatpush2.bf16.msra.mxu0 0
        %395 = vmatprep.subr.bf16.mxu0 0
        %396 = vmatpush2.bf16.msra.mxu0 0
        %397 = vmatprep.subr.bf16.mxu0 0
        %398 = vmatpush2.bf16.msra.mxu0 0
        %399 = vmatprep.subr.bf16.mxu0 0
        %400 = vmatpush2.bf16.msra.mxu0 0
        %401 = vmatprep.subr.bf16.mxu0 0
        %402 = vmatpush2.bf16.msra.mxu0 0
        %403 = vmatprep.subr.bf16.mxu0 0
        %404 = vmatpush2.bf16.msra.mxu0 0
        %405 = vmatprep.subr.bf16.mxu0 0
        %406 = vmatpush2.bf16.msra.mxu0 0
        %407 = vmatprep.subr.bf16.mxu0 0
        %408 = vmatpush2.bf16.msra.mxu0 0
        %409 = vmatprep.mubr.bf16.mxu0 0
        %410 = vmatmul.mubr.bf16.gmra.mxu0 %v315
        %v411 = vpop.f32.mrf.mxu0
        %v412 = vadd.f32 0.0, %v411
        %v413 = vpop.f32.mrf.mxu0
        %v414 = vpop.f32.mrf.mxu0
        %v415 = vadd.f32 0.0, %v414
        %v416 = vpop.f32.mrf.mxu0
        %417 = vmatprep.mubr.bf16.mxu0 0
        %418 = vmatmul.mubr.bf16.gmra.mxu0 %v318
        %v419 = vpop.f32.mrf.mxu0
        %v420 = vadd.f32 0.0, %v419
        %v421 = vpop.f32.mrf.mxu0
        %v422 = vpop.f32.mrf.mxu0
        %v423 = vadd.f32 0.0, %v422
        %v424 = vpop.f32.mrf.mxu0
        %425 = vmatprep.mubr.bf16.mxu0 0
        %426 = vmatmul.mubr.bf16.gmra.mxu0 %v321
        %v427 = vpop.f32.mrf.mxu0
        %v428 = vadd.f32 0.0, %v427
        %v429 = vpop.f32.mrf.mxu0
        %v430 = vpop.f32.mrf.mxu0
        %v431 = vadd.f32 0.0, %v430
        %v432 = vpop.f32.mrf.mxu0
        %433 = vmatprep.mubr.bf16.mxu0 0
        %434 = vmatmul.mubr.bf16.gmra.mxu0 %v324
        %v435 = vpop.f32.mrf.mxu0
        %v436 = vadd.f32 0.0, %v435
        %v437 = vpop.f32.mrf.mxu0
        %v438 = vpop.f32.mrf.mxu0
        %v439 = vadd.f32 0.0, %v438
        %v440 = vpop.f32.mrf.mxu0
        %441 = vmatprep.mubr.bf16.mxu0 0
        %442 = vmatmul.mubr.bf16.gmra.mxu0 %v327
        %v443 = vpop.f32.mrf.mxu0
        %v444 = vadd.f32 0.0, %v443
        %v445 = vpop.f32.mrf.mxu0
        %v446 = vpop.f32.mrf.mxu0
        %v447 = vadd.f32 0.0, %v446
        %v448 = vpop.f32.mrf.mxu0
        %449 = vmatprep.mubr.bf16.mxu0 0
        %450 = vmatmul.mubr.bf16.gmra.mxu0 %v330
        %v451 = vpop.f32.mrf.mxu0
        %v452 = vadd.f32 0.0, %v451
        %v453 = vpop.f32.mrf.mxu0
        %v454 = vpop.f32.mrf.mxu0
        %v455 = vadd.f32 0.0, %v454
        %v456 = vpop.f32.mrf.mxu0
        %457 = vmatprep.mubr.bf16.mxu0 0
        %458 = vmatmul.mubr.bf16.gmra.mxu0 %v333
        %v459 = vpop.f32.mrf.mxu0
        %v460 = vadd.f32 0.0, %v459
        %v461 = vpop.f32.mrf.mxu0
        %v462 = vpop.f32.mrf.mxu0
        %v463 = vadd.f32 0.0, %v462
        %v464 = vpop.f32.mrf.mxu0
        %465 = vmatprep.mubr.bf16.mxu0 0
        %466 = vmatmul.mubr.bf16.gmra.mxu0 %v336
        %v467 = vpop.f32.mrf.mxu0
        %v468 = vadd.f32 0.0, %v467
        %v469 = vpop.f32.mrf.mxu0
        %v470 = vpop.f32.mrf.mxu0
        %v471 = vadd.f32 0.0, %v470
        %v472 = vpop.f32.mrf.mxu0
        %473 = vmatprep.mubr.bf16.mxu0 0
        %474 = vmatmul.mubr.bf16.gmra.mxu0 %v339
        %v475 = vpop.f32.mrf.mxu0
        %v476 = vadd.f32 0.0, %v475
        %v477 = vpop.f32.mrf.mxu0
        %v478 = vpop.f32.mrf.mxu0
        %v479 = vadd.f32 0.0, %v478
        %v480 = vpop.f32.mrf.mxu0
        %481 = vmatprep.mubr.bf16.mxu0 0
        %482 = vmatmul.mubr.bf16.gmra.mxu0 %v342
        %v483 = vpop.f32.mrf.mxu0
        %v484 = vadd.f32 0.0, %v483
        %v485 = vpop.f32.mrf.mxu0
        %v486 = vpop.f32.mrf.mxu0
        %v487 = vadd.f32 0.0, %v486
        %v488 = vpop.f32.mrf.mxu0
        %489 = vmatprep.mubr.bf16.mxu0 0
        %490 = vmatmul.mubr.bf16.gmra.mxu0 %v345
        %v491 = vpop.f32.mrf.mxu0
        %v492 = vadd.f32 0.0, %v491
        %v493 = vpop.f32.mrf.mxu0
        %v494 = vpop.f32.mrf.mxu0
        %v495 = vadd.f32 0.0, %v494
        %v496 = vpop.f32.mrf.mxu0
        %497 = vmatprep.mubr.bf16.mxu0 0
        %498 = vmatmul.mubr.bf16.gmra.mxu0 %v348
        %v499 = vpop.f32.mrf.mxu0
        %v500 = vadd.f32 0.0, %v499
        %v501 = vpop.f32.mrf.mxu0
        %v502 = vpop.f32.mrf.mxu0
        %v503 = vadd.f32 0.0, %v502
        %v504 = vpop.f32.mrf.mxu0
        %505 = vmatprep.mubr.bf16.mxu0 0
        %506 = vmatmul.mubr.bf16.gmra.mxu0 %v351
        %v507 = vpop.f32.mrf.mxu0
        %v508 = vadd.f32 0.0, %v507
        %v509 = vpop.f32.mrf.mxu0
        %v510 = vpop.f32.mrf.mxu0
        %v511 = vadd.f32 0.0, %v510
        %v512 = vpop.f32.mrf.mxu0
        %513 = vmatprep.mubr.bf16.mxu0 0
        %514 = vmatmul.mubr.bf16.gmra.mxu0 %v354
        %v515 = vpop.f32.mrf.mxu0
        %v516 = vadd.f32 0.0, %v515
        %v517 = vpop.f32.mrf.mxu0
        %v518 = vpop.f32.mrf.mxu0
        %v519 = vadd.f32 0.0, %v518
        %v520 = vpop.f32.mrf.mxu0
        %521 = vmatprep.mubr.bf16.mxu0 0
        %522 = vmatmul.mubr.bf16.gmra.mxu0 %v357
        %v523 = vpop.f32.mrf.mxu0
        %v524 = vadd.f32 0.0, %v523
        %v525 = vpop.f32.mrf.mxu0
        %v526 = vpop.f32.mrf.mxu0
        %v527 = vadd.f32 0.0, %v526
        %v528 = vpop.f32.mrf.mxu0
        %529 = vmatprep.mubr.bf16.mxu0 0
        %530 = vmatmul.mubr.bf16.gmra.mxu0 %v360
        %v531 = vpop.f32.mrf.mxu0
        %v532 = vadd.f32 0.0, %v531
        %v533 = vpop.f32.mrf.mxu0
        %v534 = vpop.f32.mrf.mxu0
        %v535 = vadd.f32 0.0, %v534
        %v536 = vpop.f32.mrf.mxu0
        %537 = vmatprep.mubr.bf16.mxu0 0
        %538 = vmatmul.mubr.bf16.gmra.mxu0 %v363
        %v539 = vpop.f32.mrf.mxu0
        %v540 = vadd.f32 0.0, %v539
        %v541 = vpop.f32.mrf.mxu0
        %v542 = vpop.f32.mrf.mxu0
        %v543 = vadd.f32 0.0, %v542
        %v544 = vpop.f32.mrf.mxu0
        %545 = vmatprep.mubr.bf16.mxu0 0
        %546 = vmatmul.mubr.bf16.gmra.mxu0 %v366
        %v547 = vpop.f32.mrf.mxu0
        %v548 = vadd.f32 0.0, %v547
        %v549 = vpop.f32.mrf.mxu0
        %v550 = vpop.f32.mrf.mxu0
        %v551 = vadd.f32 0.0, %v550
        %v552 = vpop.f32.mrf.mxu0
        %553 = vmatprep.mubr.bf16.mxu0 0
        %554 = vmatmul.mubr.bf16.gmra.mxu0 %v369
        %v555 = vpop.f32.mrf.mxu0
        %v556 = vadd.f32 0.0, %v555
        %v557 = vpop.f32.mrf.mxu0
        %v558 = vpop.f32.mrf.mxu0
        %v559 = vadd.f32 0.0, %v558
        %v560 = vpop.f32.mrf.mxu0
        %561 = vmatprep.mubr.bf16.mxu0 0
        %562 = vmatmul.mubr.bf16.gmra.mxu0 %v372
        %v563 = vpop.f32.mrf.mxu0
        %v564 = vadd.f32 0.0, %v563
        %v565 = vpop.f32.mrf.mxu0
        %v566 = vpop.f32.mrf.mxu0
        %v567 = vadd.f32 0.0, %v566
        %v568 = vpop.f32.mrf.mxu0
        %569 = vmatprep.mubr.bf16.mxu0 0
        %570 = vmatmul.mubr.bf16.gmra.mxu0 %v375
        %v571 = vpop.f32.mrf.mxu0
        %v572 = vadd.f32 0.0, %v571
        %v573 = vpop.f32.mrf.mxu0
        %v574 = vpop.f32.mrf.mxu0
        %v575 = vpop.f32.mrf.mxu0
        %576 = vdwg.mxu0
        %v577 = vadd.f32 %v412, %v415
        %v578 = vadd.f32 %v577, %v420
        %v579 = vadd.f32 %v578, %v423
        %v580 = vadd.f32 %v579, %v428
        %v581 = vadd.f32 %v580, %v431
        %v582 = vadd.f32 %v581, %v436
        %v583 = vadd.f32 %v582, %v439
        %v584 = vadd.f32 %v583, %v444
        %v585 = vadd.f32 %v584, %v447
        %v586 = vadd.f32 %v585, %v452
        %v587 = vadd.f32 %v586, %v455
        %v588 = vadd.f32 %v587, %v460
        %v589 = vadd.f32 %v588, %v463
        %v590 = vadd.f32 %v589, %v468
        %v591 = vadd.f32 %v590, %v471
        %v592 = vadd.f32 %v591, %v476
        %v593 = vadd.f32 %v592, %v479
        %v594 = vadd.f32 %v593, %v484
        %v595 = vadd.f32 %v594, %v487
        %v596 = vadd.f32 %v595, %v492
        %v597 = vadd.f32 %v596, %v495
        %v598 = vadd.f32 %v597, %v500
        %v599 = vadd.f32 %v598, %v503
        %v600 = vadd.f32 %v599, %v508
        %v601 = vadd.f32 %v600, %v511
        %v602 = vadd.f32 %v601, %v516
        %v603 = vadd.f32 %v602, %v519
        %v604 = vadd.f32 %v603, %v524
        %v605 = vadd.f32 %v604, %v527
        %v606 = vadd.f32 %v605, %v532
        %v607 = vadd.f32 %v606, %v535
        %v608 = vadd.f32 %v607, %v540
        %v609 = vadd.f32 %v608, %v543
        %v610 = vadd.f32 %v609, %v548
        %v611 = vadd.f32 %v610, %v551
        %v612 = vadd.f32 %v611, %v556
        %v613 = vadd.f32 %v612, %v559
        %v614 = vadd.f32 %v613, %v564
        %v615 = vadd.f32 %v614, %v567
        %v616 = vadd.f32 %v615, %v572
        %v617 = vrot.slane %v616, 4
        %v618 = vadd.f32 %v616, %v617
        %v619 = vrot.slane %v618, 2
        %v620 = vadd.f32 %v618, %v619
        %v621 = vrot.slane %v620, 1
        %v622 = vadd.f32 %v620, %v621
        %v623 = vmul.f32 %v412, %v412
        %v624 = vmul.f32 %v415, %v415
        %v625 = vmul.f32 %v420, %v420
        %v626 = vmul.f32 %v423, %v423
        %v627 = vmul.f32 %v428, %v428
        %v628 = vmul.f32 %v431, %v431
        %v629 = vmul.f32 %v436, %v436
        %v630 = vmul.f32 %v439, %v439
        %v631 = vmul.f32 %v444, %v444
        %v632 = vmul.f32 %v447, %v447
        %v633 = vmul.f32 %v452, %v452
        %v634 = vmul.f32 %v455, %v455
        %v635 = vmul.f32 %v460, %v460
        %v636 = vmul.f32 %v463, %v463
        %v637 = vmul.f32 %v468, %v468
        %v638 = vmul.f32 %v471, %v471
        %v639 = vmul.f32 %v476, %v476
        %v640 = vmul.f32 %v479, %v479
        %v641 = vmul.f32 %v484, %v484
        %v642 = vmul.f32 %v487, %v487
        %v643 = vmul.f32 %v492, %v492
        %v644 = vmul.f32 %v495, %v495
        %v645 = vmul.f32 %v500, %v500
        %v646 = vmul.f32 %v503, %v503
        %v647 = vmul.f32 %v508, %v508
        %v648 = vmul.f32 %v511, %v511
        %v649 = vmul.f32 %v516, %v516
        %v650 = vmul.f32 %v519, %v519
        %v651 = vmul.f32 %v524, %v524
        %v652 = vmul.f32 %v527, %v527
        %v653 = vmul.f32 %v532, %v532
        %v654 = vmul.f32 %v535, %v535
        %v655 = vmul.f32 %v540, %v540
        %v656 = vmul.f32 %v543, %v543
        %v657 = vmul.f32 %v548, %v548
        %v658 = vmul.f32 %v551, %v551
        %v659 = vmul.f32 %v556, %v556
        %v660 = vmul.f32 %v559, %v559
        %v661 = vmul.f32 %v564, %v564
        %v662 = vmul.f32 %v567, %v567
        %v663 = vmul.f32 %v572, %v572
        %v664 = vadd.f32 %v623, %v624
        %v665 = vadd.f32 %v664, %v625
        %v666 = vadd.f32 %v665, %v626
        %v667 = vadd.f32 %v666, %v627
        %v668 = vadd.f32 %v667, %v628
        %v669 = vadd.f32 %v668, %v629
        %v670 = vadd.f32 %v669, %v630
        %v671 = vadd.f32 %v670, %v631
        %v672 = vadd.f32 %v671, %v632
        %v673 = vadd.f32 %v672, %v633
        %v674 = vadd.f32 %v673, %v634
        %v675 = vadd.f32 %v674, %v635
        %v676 = vadd.f32 %v675, %v636
        %v677 = vadd.f32 %v676, %v637
        %v678 = vadd.f32 %v677, %v638
        %v679 = vadd.f32 %v678, %v639
        %v680 = vadd.f32 %v679, %v640
        %v681 = vadd.f32 %v680, %v641
        %v682 = vadd.f32 %v681, %v642
        %v683 = vadd.f32 %v682, %v643
        %v684 = vadd.f32 %v683, %v644
        %v685 = vadd.f32 %v684, %v645
        %v686 = vadd.f32 %v685, %v646
        %v687 = vadd.f32 %v686, %v647
        %v688 = vadd.f32 %v687, %v648
        %v689 = vadd.f32 %v688, %v649
        %v690 = vadd.f32 %v689, %v650
        %v691 = vadd.f32 %v690, %v651
        %v692 = vadd.f32 %v691, %v652
        %v693 = vadd.f32 %v692, %v653
        %v694 = vadd.f32 %v693, %v654
        %v695 = vadd.f32 %v694, %v655
        %v696 = vadd.f32 %v695, %v656
        %v697 = vadd.f32 %v696, %v657
        %v698 = vadd.f32 %v697, %v658
        %v699 = vadd.f32 %v698, %v659
        %v700 = vadd.f32 %v699, %v660
        %v701 = vadd.f32 %v700, %v661
        %v702 = vadd.f32 %v701, %v662
        %v703 = vadd.f32 %v702, %v663
        %v704 = vrot.slane %v703, 4
        %v705 = vadd.f32 %v703, %v704
        %v706 = vrot.slane %v705, 2
        %v707 = vadd.f32 %v705, %v706
        %v708 = vrot.slane %v707, 1
        %v709 = vadd.f32 %v707, %v708
        %vm710 = vcmask 1040384
        %v711 = vsel %vm710, %v622, %v709
        %vm712 = vcmask 1041408
        %v713 = vsel %vm712, %v711, 0.0
        %714 = vst [vmem:[%s137] sm:$0xff] %v713
        %s715 = sand.u32 %s71, 1
        %s716 = scalar_lea.sflag [#allocation3], %s715
        %s717 = sand.u32 %s71, 1
        %s718 = smul.addr %s717, 8
        %s719 = scalar_lea.vmem [#allocation2], %s718
        // Predicated region
        $region29: #{tpu_custom_call.1} parent=27 // pred_check
          %p720 = pneg %p81
        $region30: #{tpu_custom_call.1} parent=27 // pred_check_branch
          %722 = sbr.rel (%p720) target = $region32
        $region31: #{tpu_custom_call.1} parent=27 // pred_region
          %s724 = ssub.s32 128, 128
          %725 = vsyncadd %s716, %s724
          %s726 = smul.addr %s16, 128
          %s727 = scalar_lea.hbm %s2, %s726
          %s729 = sshll.u32 %s719, 4
          %s730 = int_to_ptr.vmem [resolvable:$true] %s729
          %732 = dma.vmem_to_hbm [thread:$0]  %s730, 128, %s727, %s716
        $region32: #{tpu_custom_call.1} parent=27 // pred_fallthru
          _
      $region28: #{tpu_custom_call.1} parent=5 // pred_fallthru
        _
      %p733 = scmp.le.s32.totalorder 2, %s11
      // Predicated region
      $region33: #{tpu_custom_call.1} parent=5 // pred_check
        %p734 = pneg %p733
      $region34: #{tpu_custom_call.1} parent=5 // pred_check_branch
        %736 = sbr.rel (%p734) target = $region36
      $region35: #{tpu_custom_call.1} parent=5 // pred_region
        %s737 = ssub.s32 %s11, 2
        // Predicated region
        $region37: #{tpu_custom_call.1} parent=35 // pred_check
          %p738 = pneg %p87
        $region38: #{tpu_custom_call.1} parent=35 // pred_check_branch
          %740 = sbr.rel (%p738) target = $region40
        $region39: #{tpu_custom_call.1} parent=35 // pred_region
          %s741 = sand.u32 %s72, 1
          %s742 = scalar_lea.sflag [#allocation3], %s741
          %s743 = sand.u32 %s72, 1
          %s744 = smul.addr %s743, 8
          %s745 = scalar_lea.vmem [#allocation2], %s744
          %746 = dma.done %s742, 128
        $region40: #{tpu_custom_call.1} parent=35 // pred_fallthru
          _
      $region36: #{tpu_custom_call.1} parent=5 // pred_fallthru
        _
    $region6: #{tpu_custom_call.1} parent=1 // loop_footer
      %s15 = sadd.s32 1, %s11
    $region7: #{tpu_custom_call.1} parent=1 // loop_footer_branch
      %10 = sbr.rel target = $region3
    $region8: #{tpu_custom_call.1} parent=1 // loop_exit
      _
    %747 = vsyncpa [#allocation3], 1
    %s748 = scalar_lea.sflag [#allocation3], 1
    %749 = vsyncpa %s748, 1

</llo_original>
